<compile_context>
chip_gen: v7x
topology: tpu7x:2x2x1
jax: 0.10.0
libtpu: 0.0.40
codegen_flags: <defaults>
</compile_context>

<pallas_src>
import jax
import jax.numpy as jnp
from jax.experimental import pallas as pl
from jax.experimental.pallas import tpu as pltpu


def _round_up(x, m):
    return (x + m - 1) // m * m


def _choose_blocks(N, R, Cin, classes, itemsize):
    """Pick (bn, S) so each grid step moves ~4 MiB of in+out HBM traffic."""
    unit = (Cin + classes) * 128 * itemsize        # bytes per (batch-row, 128-lane row)
    total_units = N * R
    target_units = max(1, (4 << 20) // unit)       # ~4 MiB per step
    # Keep >= ~8 grid steps when the problem is big enough (v7x: 2 TCs + pipeline
    # depth); for small problems this simply shrinks the block.
    target_units = min(target_units, max(1, pl.cdiv(total_units, 8)))

    # Spatial-row block: multiple of 8 sublanes, or the full extent R.
    if target_units >= R or R <= 8:
        s_blk = R
    else:
        s_blk = min(R, max(8, (target_units // 8) * 8))
    bn = min(N, max(1, target_units // max(s_blk, 1)))
    return bn, s_blk


def _outconv_kernel(x_ref, w_ref, b_ref, o_ref):
    # x_ref: (bn, Cin, S, 128) VMEM block (sublane dim = S, lane dim = 128)
    # w_ref: (classes, Cin) f32 in SMEM; b_ref: (classes,) f32 in SMEM
    # o_ref: (bn, classes, S, 128) VMEM block
    cin = x_ref.shape[1]
    n_out = o_ref.shape[1]

    # Channels-outer / classes-inner: each channel slab is loaded + cast to f32
    # exactly once; only `n_out` accumulators (+ one channel slab) stay live.
    accs = [None] * n_out
    for c in range(cin):                               # Cin tiny -> unrolled
        xc = x_ref[:, c, :, :].astype(jnp.float32)     # (bn, S, 128), dense vregs
        for o in range(n_out):                         # classes tiny -> unrolled
            term = xc * w_ref[o, c]
            accs[o] = term if c == 0 else accs[o] + term

    # Direct per-class stores into the lane/sublane-dense output block.
    for o in range(n_out):
        o_ref[:, o, :, :] = (accs[o] + b_ref[o]).astype(o_ref.dtype)


@jax.jit
def out_conv(x_nchw, weight, bias):
    """1x1 conv forward. x_nchw: (N, Cin, H, W); weight: (classes, Cin, 1, 1); bias: (classes,)."""
    N, Cin, H, W = x_nchw.shape
    classes = weight.shape[0]
    HW = H * W

    # Present the spatial axis as (R, 128): lane-dense *and* sublane-dense.
    hw_pad = _round_up(HW, 128)
    x3d = x_nchw.reshape(N, Cin, HW)
    if hw_pad != HW:
        # Ragged spatial tail (rare for UNet shapes): costs one extra copy of x.
        # TODO(synk): replace with an in-kernel masked tail to avoid the pad copy.
        x3d = jnp.pad(x3d, ((0, 0), (0, 0), (0, hw_pad - HW)))
    R = hw_pad // 128
    x4d = x3d.reshape(N, Cin, R, 128)                  # free reshape (metadata only)

    w2d = weight.reshape(classes, Cin).astype(jnp.float32)   # SMEM-resident scalars
    b1d = bias.reshape(classes).astype(jnp.float32)

    bn, s_blk = _choose_blocks(N, R, Cin, classes, x_nchw.dtype.itemsize)
    grid = (pl.cdiv(N, bn), pl.cdiv(R, s_blk))

    y4d = pl.pallas_call(
        _outconv_kernel,
        out_shape=jax.ShapeDtypeStruct((N, classes, R, 128), x_nchw.dtype),
        grid=grid,
        in_specs=[
            pl.BlockSpec((bn, Cin, s_blk, 128), lambda i, j: (i, 0, j, 0)),
            pl.BlockSpec(memory_space=pltpu.MemorySpace.SMEM),   # W (classes, Cin)
            pl.BlockSpec(memory_space=pltpu.MemorySpace.SMEM),   # b (classes,)
        ],
        out_specs=pl.BlockSpec((bn, classes, s_blk, 128), lambda i, j: (i, 0, j, 0)),
        compiler_params=pltpu.CompilerParams(
            dimension_semantics=("parallel", "parallel"),
            vmem_limit_bytes=32 * 1024 * 1024),
    )(x4d, w2d, b1d)

    y3d = y4d.reshape(N, classes, hw_pad)
    if hw_pad != HW:
        y3d = y3d[:, :, :HW]
    return y3d.reshape(N, classes, H, W)               # already NCHW, no transpose


if __name__ == "__main__":
    key = jax.random.PRNGKey(0)
    kx, kw, kb = jax.random.split(key, 3)

    N, Cin, H, W = 2, 4, 16, 16
    classes = 3

    x = jax.random.normal(kx, (N, Cin, H, W), dtype=jnp.float32)

    # nn.Conv2d default init bound 1/sqrt(fan_in), fan_in = Cin for a 1x1 kernel.
    bound = 1.0 / jnp.sqrt(jnp.float32(Cin))
    weight = jax.random.uniform(kw, (classes, Cin, 1, 1), jnp.float32, -bound, bound)
    bias = jax.random.uniform(kb, (classes,), jnp.float32, -bound, bound)

    y = out_conv(x, weight, bias)
    y = jax.block_until_ready(y)

    # Correctness check against a plain-JAX reference of the 1x1 conv.
    ref = jnp.einsum("nchw,oc->nohw", x, weight.reshape(classes, Cin)) \
        + bias[None, :, None, None]
    assert y.shape == (N, classes, H, W)
    assert jnp.allclose(y, ref, atol=1e-5, rtol=1e-5)

    print("KERNEL_OK")
</pallas_src>

<mosaic_0001>
module attributes {stable_mosaic.version = 11 : i64} {
  func.func @_outconv_kernel(%arg0: i32, %arg1: i32, %arg2: memref<1x4x2x128xf32, #tpu.memory_space<vmem>>, %arg3: memref<3x4xf32, #tpu.memory_space<smem>>, %arg4: memref<3xf32, #tpu.memory_space<smem>>, %arg5: memref<1x3x2x128xf32, #tpu.memory_space<vmem>>) attributes {dimension_semantics = [#tpu.dimension_semantics<parallel>, #tpu.dimension_semantics<parallel>], iteration_bounds = array<i64: 2, 1>, scalar_prefetch = 0 : i64, scratch_operands = 0 : i64, tpu.core_type = #tpu.core_type<tc>, window_params = [{transform_indices = @transform_0, window_bounds = array<i64: 1, 4, 2, 128>}, {transform_indices = @transform_1, window_bounds = array<i64: 3, 4>}, {transform_indices = @transform_2, window_bounds = array<i64: 3>}, {transform_indices = @transform_3, window_bounds = array<i64: 1, 3, 2, 128>}]} {
    %c0 = arith.constant 0 : index
    %c0_0 = arith.constant 0 : index
    %c0_1 = arith.constant 0 : index
    %c0_2 = arith.constant 0 : index
    %0 = vector.load %arg2[%c0, %c0_0, %c0_1, %c0_2] : memref<1x4x2x128xf32, #tpu.memory_space<vmem>>, vector<1x1x2x128xf32>
    %1 = vector.shape_cast %0 : vector<1x1x2x128xf32> to vector<1x2x128xf32>
    %c0_3 = arith.constant 0 : index
    %c0_4 = arith.constant 0 : index
    %2 = memref.load %arg3[%c0_3, %c0_4] : memref<3x4xf32, #tpu.memory_space<smem>>
    %3 = vector.broadcast %2 : f32 to vector<1x2x128xf32>
    %4 = arith.mulf %1, %3 : vector<1x2x128xf32>
    %c1 = arith.constant 1 : index
    %c0_5 = arith.constant 0 : index
    %5 = memref.load %arg3[%c1, %c0_5] : memref<3x4xf32, #tpu.memory_space<smem>>
    %6 = vector.broadcast %5 : f32 to vector<1x2x128xf32>
    %7 = arith.mulf %1, %6 : vector<1x2x128xf32>
    %c2 = arith.constant 2 : index
    %c0_6 = arith.constant 0 : index
    %8 = memref.load %arg3[%c2, %c0_6] : memref<3x4xf32, #tpu.memory_space<smem>>
    %9 = vector.broadcast %8 : f32 to vector<1x2x128xf32>
    %10 = arith.mulf %1, %9 : vector<1x2x128xf32>
    %c0_7 = arith.constant 0 : index
    %c1_8 = arith.constant 1 : index
    %c0_9 = arith.constant 0 : index
    %c0_10 = arith.constant 0 : index
    %11 = vector.load %arg2[%c0_7, %c1_8, %c0_9, %c0_10] : memref<1x4x2x128xf32, #tpu.memory_space<vmem>>, vector<1x1x2x128xf32>
    %12 = vector.shape_cast %11 : vector<1x1x2x128xf32> to vector<1x2x128xf32>
    %c0_11 = arith.constant 0 : index
    %c1_12 = arith.constant 1 : index
    %13 = memref.load %arg3[%c0_11, %c1_12] : memref<3x4xf32, #tpu.memory_space<smem>>
    %14 = vector.broadcast %13 : f32 to vector<1x2x128xf32>
    %15 = arith.mulf %12, %14 : vector<1x2x128xf32>
    %16 = arith.addf %4, %15 : vector<1x2x128xf32>
    %c1_13 = arith.constant 1 : index
    %c1_14 = arith.constant 1 : index
    %17 = memref.load %arg3[%c1_13, %c1_14] : memref<3x4xf32, #tpu.memory_space<smem>>
    %18 = vector.broadcast %17 : f32 to vector<1x2x128xf32>
    %19 = arith.mulf %12, %18 : vector<1x2x128xf32>
    %20 = arith.addf %7, %19 : vector<1x2x128xf32>
    %c2_15 = arith.constant 2 : index
    %c1_16 = arith.constant 1 : index
    %21 = memref.load %arg3[%c2_15, %c1_16] : memref<3x4xf32, #tpu.memory_space<smem>>
    %22 = vector.broadcast %21 : f32 to vector<1x2x128xf32>
    %23 = arith.mulf %12, %22 : vector<1x2x128xf32>
    %24 = arith.addf %10, %23 : vector<1x2x128xf32>
    %c0_17 = arith.constant 0 : index
    %c2_18 = arith.constant 2 : index
    %c0_19 = arith.constant 0 : index
    %c0_20 = arith.constant 0 : index
    %25 = vector.load %arg2[%c0_17, %c2_18, %c0_19, %c0_20] : memref<1x4x2x128xf32, #tpu.memory_space<vmem>>, vector<1x1x2x128xf32>
    %26 = vector.shape_cast %25 : vector<1x1x2x128xf32> to vector<1x2x128xf32>
    %c0_21 = arith.constant 0 : index
    %c2_22 = arith.constant 2 : index
    %27 = memref.load %arg3[%c0_21, %c2_22] : memref<3x4xf32, #tpu.memory_space<smem>>
    %28 = vector.broadcast %27 : f32 to vector<1x2x128xf32>
    %29 = arith.mulf %26, %28 : vector<1x2x128xf32>
    %30 = arith.addf %16, %29 : vector<1x2x128xf32>
    %c1_23 = arith.constant 1 : index
    %c2_24 = arith.constant 2 : index
    %31 = memref.load %arg3[%c1_23, %c2_24] : memref<3x4xf32, #tpu.memory_space<smem>>
    %32 = vector.broadcast %31 : f32 to vector<1x2x128xf32>
    %33 = arith.mulf %26, %32 : vector<1x2x128xf32>
    %34 = arith.addf %20, %33 : vector<1x2x128xf32>
    %c2_25 = arith.constant 2 : index
    %c2_26 = arith.constant 2 : index
    %35 = memref.load %arg3[%c2_25, %c2_26] : memref<3x4xf32, #tpu.memory_space<smem>>
    %36 = vector.broadcast %35 : f32 to vector<1x2x128xf32>
    %37 = arith.mulf %26, %36 : vector<1x2x128xf32>
    %38 = arith.addf %24, %37 : vector<1x2x128xf32>
    %c0_27 = arith.constant 0 : index
    %c3 = arith.constant 3 : index
    %c0_28 = arith.constant 0 : index
    %c0_29 = arith.constant 0 : index
    %39 = vector.load %arg2[%c0_27, %c3, %c0_28, %c0_29] : memref<1x4x2x128xf32, #tpu.memory_space<vmem>>, vector<1x1x2x128xf32>
    %40 = vector.shape_cast %39 : vector<1x1x2x128xf32> to vector<1x2x128xf32>
    %c0_30 = arith.constant 0 : index
    %c3_31 = arith.constant 3 : index
    %41 = memref.load %arg3[%c0_30, %c3_31] : memref<3x4xf32, #tpu.memory_space<smem>>
    %42 = vector.broadcast %41 : f32 to vector<1x2x128xf32>
    %43 = arith.mulf %40, %42 : vector<1x2x128xf32>
    %44 = arith.addf %30, %43 : vector<1x2x128xf32>
    %c1_32 = arith.constant 1 : index
    %c3_33 = arith.constant 3 : index
    %45 = memref.load %arg3[%c1_32, %c3_33] : memref<3x4xf32, #tpu.memory_space<smem>>
    %46 = vector.broadcast %45 : f32 to vector<1x2x128xf32>
    %47 = arith.mulf %40, %46 : vector<1x2x128xf32>
    %48 = arith.addf %34, %47 : vector<1x2x128xf32>
    %c2_34 = arith.constant 2 : index
    %c3_35 = arith.constant 3 : index
    %49 = memref.load %arg3[%c2_34, %c3_35] : memref<3x4xf32, #tpu.memory_space<smem>>
    %50 = vector.broadcast %49 : f32 to vector<1x2x128xf32>
    %51 = arith.mulf %40, %50 : vector<1x2x128xf32>
    %52 = arith.addf %38, %51 : vector<1x2x128xf32>
    %c0_36 = arith.constant 0 : index
    %53 = memref.load %arg4[%c0_36] : memref<3xf32, #tpu.memory_space<smem>>
    %54 = vector.broadcast %53 : f32 to vector<1x2x128xf32>
    %55 = arith.addf %44, %54 : vector<1x2x128xf32>
    %c0_37 = arith.constant 0 : index
    %c0_38 = arith.constant 0 : index
    %c0_39 = arith.constant 0 : index
    %c0_40 = arith.constant 0 : index
    %56 = vector.load %arg5[%c0_37, %c0_38, %c0_39, %c0_40] : memref<1x3x2x128xf32, #tpu.memory_space<vmem>>, vector<1x1x2x128xf32>
    %57 = vector.shape_cast %56 : vector<1x1x2x128xf32> to vector<1x2x128xf32>
    %58 = vector.shape_cast %55 : vector<1x2x128xf32> to vector<1x1x2x128xf32>
    tpu.vector_store %arg5[%c0_37, %c0_38, %c0_39, %c0_40], %58 {strides = array<i32>} : memref<1x3x2x128xf32, #tpu.memory_space<vmem>>, vector<1x1x2x128xf32>,
    %c1_41 = arith.constant 1 : index
    %59 = memref.load %arg4[%c1_41] : memref<3xf32, #tpu.memory_space<smem>>
    %60 = vector.broadcast %59 : f32 to vector<1x2x128xf32>
    %61 = arith.addf %48, %60 : vector<1x2x128xf32>
    %c0_42 = arith.constant 0 : index
    %c1_43 = arith.constant 1 : index
    %c0_44 = arith.constant 0 : index
    %c0_45 = arith.constant 0 : index
    %62 = vector.load %arg5[%c0_42, %c1_43, %c0_44, %c0_45] : memref<1x3x2x128xf32, #tpu.memory_space<vmem>>, vector<1x1x2x128xf32>
    %63 = vector.shape_cast %62 : vector<1x1x2x128xf32> to vector<1x2x128xf32>
    %64 = vector.shape_cast %61 : vector<1x2x128xf32> to vector<1x1x2x128xf32>
    tpu.vector_store %arg5[%c0_42, %c1_43, %c0_44, %c0_45], %64 {strides = array<i32>} : memref<1x3x2x128xf32, #tpu.memory_space<vmem>>, vector<1x1x2x128xf32>,
    %c2_46 = arith.constant 2 : index
    %65 = memref.load %arg4[%c2_46] : memref<3xf32, #tpu.memory_space<smem>>
    %66 = vector.broadcast %65 : f32 to vector<1x2x128xf32>
    %67 = arith.addf %52, %66 : vector<1x2x128xf32>
    %c0_47 = arith.constant 0 : index
    %c2_48 = arith.constant 2 : index
    %c0_49 = arith.constant 0 : index
    %c0_50 = arith.constant 0 : index
    %68 = vector.load %arg5[%c0_47, %c2_48, %c0_49, %c0_50] : memref<1x3x2x128xf32, #tpu.memory_space<vmem>>, vector<1x1x2x128xf32>
    %69 = vector.shape_cast %68 : vector<1x1x2x128xf32> to vector<1x2x128xf32>
    %70 = vector.shape_cast %67 : vector<1x2x128xf32> to vector<1x1x2x128xf32>
    tpu.vector_store %arg5[%c0_47, %c2_48, %c0_49, %c0_50], %70 {strides = array<i32>} : memref<1x3x2x128xf32, #tpu.memory_space<vmem>>, vector<1x1x2x128xf32>,
    return
  }
  func.func @transform_0(%arg0: i32, %arg1: i32) -> (i32, i32, i32, i32) {
    %c0_i32 = arith.constant 0 : i32
    %c0_i32_0 = arith.constant 0 : i32
    %c0_i32_1 = arith.constant 0 : i32
    return %arg0, %c0_i32, %arg1, %c0_i32_0 : i32, i32, i32, i32
  }
  func.func @transform_1(%arg0: i32, %arg1: i32) -> (i32, i32) {
    %c0_i32 = arith.constant 0 : i32
    %c0_i32_0 = arith.constant 0 : i32
    %c0_i32_1 = arith.constant 0 : i32
    return %c0_i32, %c0_i32_0 : i32, i32
  }
  func.func @transform_2(%arg0: i32, %arg1: i32) -> i32 {
    %c0_i32 = arith.constant 0 : i32
    %c0_i32_0 = arith.constant 0 : i32
    return %c0_i32 : i32
  }
  func.func @transform_3(%arg0: i32, %arg1: i32) -> (i32, i32, i32, i32) {
    %c0_i32 = arith.constant 0 : i32
    %c0_i32_0 = arith.constant 0 : i32
    %c0_i32_1 = arith.constant 0 : i32
    return %arg0, %c0_i32, %arg1, %c0_i32_0 : i32, i32, i32, i32
  }
}

</mosaic_0001>

<llo_original>
// kernel: out_conv.1
$region0: #{out_conv.1}
  #allocation0 [shape = 'u32[]', space=smem, size = 0x4, offset = 0x4, fixed_abs, tag = 'smem constant byte address 0x4 - core index']
  #allocation1 [shape = 'u32[144,128]{1,0:T(1,128)}', space=vmem, size = 0x12000, scoped, tag = 'internal scratch']
  %s0 = inlined_call_operand.vmem [shape: f32[2,4,2,128], index: 0, kind: input, shape index: {}]
  %s1 = inlined_call_operand.vmem [shape: f32[3,4], index: 1, kind: input, shape index: {}]
  %s2 = inlined_call_operand.vmem [shape: f32[3], index: 2, kind: input, shape index: {}]
  %s3 = inlined_call_operand.vmem [shape: f32[2,3,2,128], index: 3, kind: output, shape index: {}]
  %s4 = sld [smem:[#allocation0]]
  $region53: #{out_conv.1} parent=0
    _
  %s6 = ssub.s32 1, %s4
  %s7 = scalar_select 0, %s6, %s4
  $region1: #{out_conv.1} parent=0
    #allocation2 [shape = 'u8[2048]{0}', space=smem, size = 0x800, scoped, tag = 'input window, operand 1, single buffered']
    #allocation3 [shape = 's32[2]{0}', space=sflag, size = 0x8, scoped, tag = 'scoped memory for out_conv.1']
    #allocation4 [shape = 'u8[512]{0}', space=smem, size = 0x200, scoped, tag = 'input window, operand 2, single buffered']
    #allocation5 [shape = 's32[1]{0}', space=sflag, size = 0x4, scoped, tag = 'scoped memory for out_conv.1']
    %8 = vsyncpa [#allocation3], 0
    %9 = vsyncpa [#allocation5], 0
    loop: start=0, step=1, limit=4
    $region2: #{out_conv.1} parent=1 // loop_pre_header
      _
    $region3: #{out_conv.1} parent=1 // loop_header
      %s11 = sphi 0, %s15
      %p12 = scmp.ge.s32.totalorder %s11, 4
      %s18 = sphi 0, %s30
      %s19 = sphi 0, %s26
      %s20 = sphi 0, %s18
      %s21 = sphi 0, %s19
      %s22 = sphi 0, %s20
      %s23 = sphi 0, %s21
      %s35 = sphi 0, %s37
      %s38 = sphi 0, %s35
      %s39 = sphi 0, %s38
      %s55 = sphi 0, %s39
      %s59 = sphi 0, %s59
      %s61 = sphi 0, %s59
      %s62 = sphi 0, %s61
      %s76 = sphi 0, %s62
      %s80 = sphi 0, %s80
      %s82 = sphi 0, %s80
      %s83 = sphi 0, %s82
      %s97 = sphi 0, %s83
      %s105 = sphi 0, %s107
      %s108 = sphi 0, %s105
      %s109 = sphi 0, %s108
      %s125 = sphi 0, %s109
    $region4: #{out_conv.1} parent=1 // loop_header_branch
      %14 = sbr.rel (%p12) target = $region8
    $region5: #{out_conv.1} parent=1 // loop_body
      %s16 = ssub.s32 %s11, 1
      %s17 = ssub.s32 %s11, 2
      %s24 = sadd.s32 1, %s19
      %p25 = scmp.ge.s32.totalorder %s24, 1
      %s26 = scalar_select %p25, 0, %s24
      %s27 = sadd.s32 1, %s18
      %s28 = scalar_select %p25, %s27, %s18
      %p29 = scmp.ge.s32.totalorder %s28, 2
      %s30 = scalar_select %p29, 0, %s28
      %s31 = ssub.s32 %s18, %s30
      %s32 = ssub.s32 %s19, %s26
      %s33 = sor.u32 %s31, %s32
      %p34 = scmp.eq.s32.totalorder %s33, 0
      %s36 = sadd.s32 %s35, 1
      %s37 = scalar_select %p34, %s35, %s36
      %p40 = pneg %p34
      %p41 = scmp.eq.s32.totalorder %s11, 1
      %p42 = por %p40, %p41
      %p43 = scmp.ne.s32.totalorder %s35, %s38
      %p44 = scmp.eq.s32.totalorder %s11, 0
      %p45 = por %p43, %p44
      %p46 = scmp.ne.s32.totalorder %s35, %s38
      %p47 = scmp.eq.s32.totalorder %s16, 1
      %p48 = por %p46, %p47
      %p49 = scmp.ne.s32.totalorder %s38, %s39
      %p50 = scmp.eq.s32.totalorder %s16, 0
      %p51 = por %p49, %p50
      %p52 = scmp.ne.s32.totalorder %s38, %s39
      %p53 = scmp.eq.s32.totalorder %s17, 1
      %p54 = por %p52, %p53
      %p56 = scmp.ne.s32.totalorder %s39, %s55
      %p57 = scmp.eq.s32.totalorder %s17, 0
      %p58 = por %p56, %p57
      %s60 = sadd.s32 %s59, 1
      %p63 = scmp.eq.s32.totalorder %s11, 1
      %p64 = scmp.ne.s32.totalorder %s59, %s61
      %p65 = scmp.eq.s32.totalorder %s11, 0
      %p66 = por %p64, %p65
      %p67 = scmp.ne.s32.totalorder %s59, %s61
      %p68 = scmp.eq.s32.totalorder %s16, 1
      %p69 = por %p67, %p68
      %p70 = scmp.ne.s32.totalorder %s61, %s62
      %p71 = scmp.eq.s32.totalorder %s16, 0
      %p72 = por %p70, %p71
      %p73 = scmp.ne.s32.totalorder %s61, %s62
      %p74 = scmp.eq.s32.totalorder %s17, 1
      %p75 = por %p73, %p74
      %p77 = scmp.ne.s32.totalorder %s62, %s76
      %p78 = scmp.eq.s32.totalorder %s17, 0
      %p79 = por %p77, %p78
      %s81 = sadd.s32 %s80, 1
      %p84 = scmp.eq.s32.totalorder %s11, 1
      %p85 = scmp.ne.s32.totalorder %s80, %s82
      %p86 = scmp.eq.s32.totalorder %s11, 0
      %p87 = por %p85, %p86
      %p88 = scmp.ne.s32.totalorder %s80, %s82
      %p89 = scmp.eq.s32.totalorder %s16, 1
      %p90 = por %p88, %p89
      %p91 = scmp.ne.s32.totalorder %s82, %s83
      %p92 = scmp.eq.s32.totalorder %s16, 0
      %p93 = por %p91, %p92
      %p94 = scmp.ne.s32.totalorder %s82, %s83
      %p95 = scmp.eq.s32.totalorder %s17, 1
      %p96 = por %p94, %p95
      %p98 = scmp.ne.s32.totalorder %s83, %s97
      %p99 = scmp.eq.s32.totalorder %s17, 0
      %p100 = por %p98, %p99
      %s101 = ssub.s32 %s18, %s30
      %s102 = ssub.s32 %s19, %s26
      %s103 = sor.u32 %s101, %s102
      %p104 = scmp.eq.s32.totalorder %s103, 0
      %s106 = sadd.s32 %s105, 1
      %s107 = scalar_select %p104, %s105, %s106
      %p110 = pneg %p104
      %p111 = scmp.eq.s32.totalorder %s11, 1
      %p112 = por %p110, %p111
      %p113 = scmp.ne.s32.totalorder %s105, %s108
      %p114 = scmp.eq.s32.totalorder %s11, 0
      %p115 = por %p113, %p114
      %p116 = scmp.ne.s32.totalorder %s105, %s108
      %p117 = scmp.eq.s32.totalorder %s16, 1
      %p118 = por %p116, %p117
      %p119 = scmp.ne.s32.totalorder %s108, %s109
      %p120 = scmp.eq.s32.totalorder %s16, 0
      %p121 = por %p119, %p120
      %p122 = scmp.ne.s32.totalorder %s108, %s109
      %p123 = scmp.eq.s32.totalorder %s17, 1
      %p124 = por %p122, %p123
      %p126 = scmp.ne.s32.totalorder %s109, %s125
      %p127 = scmp.eq.s32.totalorder %s17, 0
      %p128 = por %p126, %p127
      %p129 = scmp.le.s32.totalorder 1, %s11
      %p130 = scmp.lt.s32.totalorder %s11, 3
      %p131 = pnand %p129, %p130
      %p132 = pneg %p131
      // Predicated region
      $region9: #{out_conv.1} parent=5 // pred_check
        _
      $region10: #{out_conv.1} parent=5 // pred_check_branch
        %134 = sbr.rel (%p131) target = $region12
      $region11: #{out_conv.1} parent=5 // pred_region
        %s135 = ssub.s32 %s11, 1
        // Predicated region
        $region13: #{out_conv.1} parent=11 // pred_check
          %p136 = pneg %p72
        $region14: #{out_conv.1} parent=11 // pred_check_branch
          %138 = sbr.rel (%p136) target = $region16
        $region15: #{out_conv.1} parent=11 // pred_region
          %s140 = ssub.s32 64, 64
          %141 = vsyncadd [#allocation3], %s140
          %s143 = sshll.u32 %s1, 4
          %s144 = int_to_ptr.vmem [resolvable:$true] %s143
          %146 = dma.vmem_to_smem %s144, 64, [#allocation2], [#allocation3]
        $region16: #{out_conv.1} parent=11 // pred_fallthru
          _
        // Predicated region
        $region17: #{out_conv.1} parent=11 // pred_check
          %p147 = pneg %p93
        $region18: #{out_conv.1} parent=11 // pred_check_branch
          %149 = sbr.rel (%p147) target = $region20
        $region19: #{out_conv.1} parent=11 // pred_region
          %s151 = ssub.s32 16, 16
          %152 = vsyncadd [#allocation5], %s151
          %s154 = sshll.u32 %s2, 4
          %s155 = int_to_ptr.vmem [resolvable:$true] %s154
          %157 = dma.vmem_to_smem %s155, 16, [#allocation4], [#allocation5]
        $region20: #{out_conv.1} parent=11 // pred_fallthru
          _
      $region12: #{out_conv.1} parent=5 // pred_fallthru
        _
      %p158 = scmp.lt.s32.totalorder %s11, 2
      // Predicated region
      $region21: #{out_conv.1} parent=5 // pred_check
        %p159 = pneg %p158
      $region22: #{out_conv.1} parent=5 // pred_check_branch
        %161 = sbr.rel (%p159) target = $region24
      $region23: #{out_conv.1} parent=5 // pred_region
        // Predicated region
        $region25: #{out_conv.1} parent=23 // pred_check
          %p162 = pneg %p45
        $region26: #{out_conv.1} parent=23 // pred_check_branch
          %164 = sbr.rel (%p162) target = $region28
        $region27: #{out_conv.1} parent=23 // pred_region
          %p165 = scmp.lt.s32.totalorder %s18, 1
          %s166 = scalar_select %p165, %s18, 1
          %p167 = scmp.lt.s32.totalorder %s19, 0
          %s168 = scalar_select %p167, %s19, 0
          %s169 = smul.addr %s166, 4
          %s170 = sadd.s32 %s168, %s169
          %s171 = smul.addr %s170, 2
          %s172 = scalar_lea.vmem %s0, %s171
        $region28: #{out_conv.1} parent=23 // pred_fallthru
          _
      $region24: #{out_conv.1} parent=5 // pred_fallthru
        _
      %p173 = scmp.le.s32.totalorder 1, %s11
      %p174 = scmp.lt.s32.totalorder %s11, 3
      %p175 = pnand %p173, %p174
      %p176 = pneg %p175
      // Predicated region
      $region29: #{out_conv.1} parent=5 // pred_check
        _
      $region30: #{out_conv.1} parent=5 // pred_check_branch
        %178 = sbr.rel (%p175) target = $region32
      $region31: #{out_conv.1} parent=5 // pred_region
        %s179 = ssub.s32 %s11, 1
        // Predicated region
        $region33: #{out_conv.1} parent=31 // pred_check
          %p180 = pneg %p72
        $region34: #{out_conv.1} parent=31 // pred_check_branch
          %182 = sbr.rel (%p180) target = $region36
        $region35: #{out_conv.1} parent=31 // pred_region
          %183 = dma.done [#allocation3], 64
        $region36: #{out_conv.1} parent=31 // pred_fallthru
          _
        // Predicated region
        $region37: #{out_conv.1} parent=31 // pred_check
          %p184 = pneg %p93
        $region38: #{out_conv.1} parent=31 // pred_check_branch
          %186 = sbr.rel (%p184) target = $region40
        $region39: #{out_conv.1} parent=31 // pred_region
          %187 = dma.done [#allocation5], 16
        $region40: #{out_conv.1} parent=31 // pred_fallthru
          _
        %188 = sfence
        %p189 = scmp.lt.s32.totalorder %s20, 1
        %s190 = scalar_select %p189, %s20, 1
        %p191 = scmp.lt.s32.totalorder %s21, 0
        %s192 = scalar_select %p191, %s21, 0
        %s193 = smul.addr %s190, 4
        %s194 = sadd.s32 %s192, %s193
        %s195 = smul.addr %s194, 2
        %s196 = scalar_lea.vmem %s0, %s195
        %p197 = pneg %p51
        %p198 = pneg %p48
        %p199 = pneg %p72
        %p200 = pneg %p69
        %p201 = pneg %p93
        %p202 = pneg %p90
        %p203 = pneg %p121
        %p204 = pneg %p118
        %p205 = scmp.lt.s32.totalorder %s20, 1
        %s206 = scalar_select %p205, %s20, 1
        %p207 = scmp.lt.s32.totalorder %s21, 0
        %s208 = scalar_select %p207, %s21, 0
        %s209 = smul.addr %s206, 3
        %s210 = sadd.s32 %s208, %s209
        %s211 = smul.addr %s210, 2
        %s212 = scalar_lea.vmem %s3, %s211
        %p213 = scmp.lt.s32.totalorder %s20, 1
        %s214 = scalar_select %p213, %s20, 1
        %p215 = scmp.lt.s32.totalorder %s21, 0
        %s216 = scalar_select %p215, %s21, 0
        %s217 = smul.addr %s214, 4
        %s218 = sadd.s32 %s216, %s217
        %s219 = smul.addr %s218, 2
        %s220 = scalar_lea.vmem %s0, %s219
        %p221 = scmp.lt.s32.totalorder %s20, 1
        %s222 = scalar_select %p221, %s20, 1
        %p223 = scmp.lt.s32.totalorder %s21, 0
        %s224 = scalar_select %p223, %s21, 0
        %s225 = smul.addr %s222, 3
        %s226 = sadd.s32 %s224, %s225
        %s227 = smul.addr %s226, 2
        %s228 = scalar_lea.vmem %s3, %s227
        %v229 = vld [vmem:[%s220] sm:$0x3]
        %s230 = sld [smem:[#allocation2]]
        %v231 = vstv %s230
        %v232 = vmul.f32 %v229, %v231
        %s233 = sld [smem:[#allocation2 + $0x80]]
        %v234 = vstv %s233
        %v235 = vmul.f32 %v229, %v234
        %s236 = sld [smem:[#allocation2 + $0x100]]
        %v237 = vstv %s236
        %v238 = vmul.f32 %v229, %v237
        %s239 = scalar_lea.vmem %s220, 2
        %v240 = vld [vmem:[%s239] sm:$0x3]
        %s241 = sld [smem:[#allocation2 + $0x1]]
        %v242 = vstv %s241
        %v243 = vmul.f32 %v240, %v242
        %v244 = vadd.f32 %v232, %v243
        %s245 = sld [smem:[#allocation2 + $0x81]]
        %v246 = vstv %s245
        %v247 = vmul.f32 %v240, %v246
        %v248 = vadd.f32 %v235, %v247
        %s249 = sld [smem:[#allocation2 + $0x101]]
        %v250 = vstv %s249
        %v251 = vmul.f32 %v240, %v250
        %v252 = vadd.f32 %v238, %v251
        %s253 = scalar_lea.vmem %s220, 4
        %v254 = vld [vmem:[%s253] sm:$0x3]
        %s255 = sld [smem:[#allocation2 + $0x2]]
        %v256 = vstv %s255
        %v257 = vmul.f32 %v254, %v256
        %v258 = vadd.f32 %v244, %v257
        %s259 = sld [smem:[#allocation2 + $0x82]]
        %v260 = vstv %s259
        %v261 = vmul.f32 %v254, %v260
        %v262 = vadd.f32 %v248, %v261
        %s263 = sld [smem:[#allocation2 + $0x102]]
        %v264 = vstv %s263
        %v265 = vmul.f32 %v254, %v264
        %v266 = vadd.f32 %v252, %v265
        %s267 = scalar_lea.vmem %s220, 6
        %v268 = vld [vmem:[%s267] sm:$0x3]
        %s269 = sld [smem:[#allocation2 + $0x3]]
        %v270 = vstv %s269
        %v271 = vmul.f32 %v268, %v270
        %v272 = vadd.f32 %v258, %v271
        %s273 = sld [smem:[#allocation2 + $0x83]]
        %v274 = vstv %s273
        %v275 = vmul.f32 %v268, %v274
        %v276 = vadd.f32 %v262, %v275
        %s277 = sld [smem:[#allocation2 + $0x103]]
        %v278 = vstv %s277
        %v279 = vmul.f32 %v268, %v278
        %v280 = vadd.f32 %v266, %v279
        %s281 = sld [smem:[#allocation4]]
        %v282 = vstv %s281
        %v283 = vadd.f32 %v272, %v282
        %284 = vst [vmem:[%s228] sm:$0x3] %v283
        %s285 = sld [smem:[#allocation4 + $0x1]]
        %v286 = vstv %s285
        %v287 = vadd.f32 %v276, %v286
        %s288 = scalar_lea.vmem %s228, 2
        %289 = vst [vmem:[%s288] sm:$0x3] %v287
        %s290 = sld [smem:[#allocation4 + $0x2]]
        %v291 = vstv %s290
        %v292 = vadd.f32 %v280, %v291
        %s293 = scalar_lea.vmem %s228, 4
        %294 = vst [vmem:[%s293] sm:$0x3] %v292
        %p295 = scmp.lt.s32.totalorder %s20, 1
        %s296 = scalar_select %p295, %s20, 1
        %p297 = scmp.lt.s32.totalorder %s21, 0
        %s298 = scalar_select %p297, %s21, 0
        %s299 = smul.addr %s296, 3
        %s300 = sadd.s32 %s298, %s299
        %s301 = smul.addr %s300, 2
        %s302 = scalar_lea.vmem %s3, %s301
        // Predicated region
        $region41: #{out_conv.1} parent=31 // pred_check
          %p303 = pneg %p118
        $region42: #{out_conv.1} parent=31 // pred_check_branch
          %305 = sbr.rel (%p303) target = $region44
        $region43: #{out_conv.1} parent=31 // pred_region
          _
        $region44: #{out_conv.1} parent=31 // pred_fallthru
          _
      $region32: #{out_conv.1} parent=5 // pred_fallthru
        _
      %p306 = scmp.le.s32.totalorder 2, %s11
      // Predicated region
      $region45: #{out_conv.1} parent=5 // pred_check
        %p307 = pneg %p306
      $region46: #{out_conv.1} parent=5 // pred_check_branch
        %309 = sbr.rel (%p307) target = $region48
      $region47: #{out_conv.1} parent=5 // pred_region
        %s310 = ssub.s32 %s11, 2
        // Predicated region
        $region49: #{out_conv.1} parent=47 // pred_check
          %p311 = pneg %p124
        $region50: #{out_conv.1} parent=47 // pred_check_branch
          %313 = sbr.rel (%p311) target = $region52
        $region51: #{out_conv.1} parent=47 // pred_region
          %p314 = scmp.lt.s32.totalorder %s22, 1
          %s315 = scalar_select %p314, %s22, 1
          %p316 = scmp.lt.s32.totalorder %s23, 0
          %s317 = scalar_select %p316, %s23, 0
          %s318 = smul.addr %s315, 3
          %s319 = sadd.s32 %s317, %s318
          %s320 = smul.addr %s319, 2
          %s321 = scalar_lea.vmem %s3, %s320
        $region52: #{out_conv.1} parent=47 // pred_fallthru
          _
      $region48: #{out_conv.1} parent=5 // pred_fallthru
        _
    $region6: #{out_conv.1} parent=1 // loop_footer
      %s15 = sadd.s32 1, %s11
    $region7: #{out_conv.1} parent=1 // loop_footer_branch
      %10 = sbr.rel target = $region3
    $region8: #{out_conv.1} parent=1 // loop_exit
      _
    %322 = vsyncpa [#allocation3], 1
    %s323 = scalar_lea.sflag [#allocation3], 1
    %324 = vsyncpa %s323, 1
    %325 = vsyncpa [#allocation5], 1

</llo_original>
